<compile_context>
chip_gen: v7x
topology: tpu7x:2x2x1
jax: 0.10.0
libtpu: 0.0.40
codegen_flags: <defaults>
</compile_context>

<pallas_src>
import functools

import jax
import jax.numpy as jnp
from jax.experimental import pallas as pl
from jax.experimental.pallas import tpu as pltpu


def _round_up(x, m):
    return ((x + m - 1) // m) * m


def _device_profile():
    """VMEM capacity and TensorCore count (conservative defaults if the query
    is unavailable): v5e/v6e -> 128 MiB / 1 TC, v7x -> 64 MiB / 2 TC."""
    vmem = 64 << 20
    try:
        info = pltpu.get_tpu_info()
        vmem = int(getattr(info, "vmem_capacity_bytes", vmem))
    except Exception:
        pass
    n_cores = 2 if vmem <= (64 << 20) else 1
    return vmem, n_cores


def _choose_tile_atoms(n_atoms, stream_bytes, temp_bytes, const_bytes,
                       vmem_budget_bytes, n_cores, max_tile=4096):
    """Largest multiple-of-128 atom tile fitting the VMEM budget.  Only the
    per-atom streams (X, species, out) are pipeline double-buffered; kernel
    temporaries are counted once and the constant tables once (they live as
    unblocked VMEM residents).  The tile never exceeds the padded atom count,
    and on 2-TC parts (v7x) it is capped so the grid keeps >= 2 steps for
    dimension_semantics=('parallel',)."""
    denom = 2 * stream_bytes + temp_bytes
    avail = max(vmem_budget_bytes - const_bytes, 128 * denom)
    tile_mem = max(128, (avail // denom) // 128 * 128)
    tile_need = max(128, _round_up(n_atoms, 128))
    tile = min(max_tile, tile_mem, tile_need)
    if n_cores >= 2 and n_atoms > 128:
        tile = min(tile, max(128, _round_up(-(-n_atoms // n_cores), 128)))
    return int(max(128, (tile // 128) * 128))


def _ace_energy_kernel(x_ref, sp_ref, wbig_ref, mred_ref, bsel_ref, lane_sp_ref,
                       out_ref, *, group_width):
    f32 = jnp.float32
    wg = group_width
    x = x_ref[...]                                               # (TN, Fp) bf16

    # One wide MXU pass over all weight / selection tables; columns are three
    # 128-lane-aligned groups [A | B | C] with identical column layout
    # [r0(S) | r1(S) | t2(T2) | t3(T3) | 0-pad].
    y = jnp.dot(x, wbig_ref[...], preferred_element_type=f32)    # (TN, 3*Wgp)
    a = y[:, 0 * wg:1 * wg]
    b = y[:, 1 * wg:2 * wg]
    c = y[:, 2 * wg:3 * wg]
    # A*B*C: [r0 | r1 | a2a*a2b | a3a*a3b*a3c | 0]   (VPU, f32)
    p = a * b * c                                                # (TN, Wgp)

    # Species-resolved per-nu energies: block-diag [I_S; I_S; m2^T; m3^T].
    r = jnp.dot(p, mred_ref[...], preferred_element_type=f32)    # (TN, 4S)

    # Select each atom's own species column per nu and collapse to (TN, n_nu).
    # Output already has atoms on sublanes -> one store per tile.
    oh4 = (lane_sp_ref[...] == sp_ref[...]).astype(f32)          # (TN, 4S)
    e = jnp.dot(r * oh4, bsel_ref[...], preferred_element_type=f32)
    out_ref[...] = e.astype(out_ref.dtype)


def ace_evaluator_forward(comp, rad, sph_blocks, species_idx,
                          combine_indices, multipliers, n_species,
                          tile_atoms=None, feature_dtype=jnp.bfloat16):
    """Returns (total_energy, per-atom energies (N, 4)) matching the module's
    torch.stack([composition, radial, nu2, nu3], dim=1) and torch.sum."""
    N, C = comp.shape
    F_rad = rad.shape[1]
    S = int(n_species)
    n_nu = 4   # TODO(synk): nu_max is fixed at 3 here; generalize the column
    #            layout for other len(E_max) if needed.

    sph_flat = [jnp.reshape(blk, (blk.shape[0], -1)) for blk in sph_blocks]
    F_sph = sum(blk.shape[1] for blk in sph_flat)

    idx2 = jnp.asarray(combine_indices[2], jnp.int32)
    idx3 = jnp.asarray(combine_indices[3], jnp.int32)
    T2, T3 = int(idx2.shape[0]), int(idx3.shape[0])

    rad_off = C
    sph_off = C + F_rad
    bias_col = sph_off + F_sph                 # constant-1 pass-through feature
    Fp = _round_up(bias_col + 1, 128)          # lane-dense packed feature width
    feat_itemsize = jnp.dtype(feature_dtype).itemsize

    # Column layout inside each weight group.
    o_r0, o_r1, o_t2, o_t3 = 0, S, 2 * S, 2 * S + T2
    wg_raw = 2 * S + T2 + T3
    Wgp = _round_up(wg_raw, 128)               # lane-aligned group width

    m0 = jnp.float32(multipliers[0])
    m1 = jnp.asarray(multipliers[1], jnp.float32)     # (S, F_rad)
    m2 = jnp.asarray(multipliers[2], jnp.float32)     # (S, T2)
    m3 = jnp.asarray(multipliers[3], jnp.float32)     # (S, T3)

    def sel_into(g, cols, col_off, t):
        return g.at[sph_off + cols, col_off + jnp.arange(t)].set(1.0)

    # Group A: nu=0/1 weights + first polyeval factors.
    wa = jnp.zeros((Fp, Wgp), jnp.float32)
    wa = wa.at[0:C, o_r0:o_r0 + S].set(m0)
    wa = wa.at[rad_off:rad_off + F_rad, o_r1:o_r1 + S].set(m1.T)
    wa = sel_into(wa, idx2[:, 0], o_t2, T2)
    wa = sel_into(wa, idx3[:, 0], o_t3, T3)
    # Group B: pass-through for nu<=1 (bias row) + second polyeval factors.
    wb = jnp.zeros((Fp, Wgp), jnp.float32)
    wb = wb.at[bias_col, o_r0:o_t2].set(1.0)
    wb = sel_into(wb, idx2[:, 1], o_t2, T2)
    wb = sel_into(wb, idx3[:, 1], o_t3, T3)
    # Group C: pass-through for nu<=2 + third polyeval factor (nu=3).
    wc = jnp.zeros((Fp, Wgp), jnp.float32)
    wc = wc.at[bias_col, o_r0:o_t3].set(1.0)
    wc = sel_into(wc, idx3[:, 2], o_t3, T3)
    wbig = jnp.concatenate([wa, wb, wc], axis=1).astype(feature_dtype)  # (Fp, 3Wgp)

    # Block-diagonal reduction [I_S; I_S; m2^T; m3^T] -> species-resolved per-nu.
    eye_s = jnp.eye(S, dtype=jnp.float32)
    mred = jnp.zeros((Wgp, n_nu * S), jnp.float32)
    mred = mred.at[o_r0:o_r0 + S, 0 * S:1 * S].set(eye_s)
    mred = mred.at[o_r1:o_r1 + S, 1 * S:2 * S].set(eye_s)
    mred = mred.at[o_t2:o_t2 + T2, 2 * S:3 * S].set(m2.T)
    mred = mred.at[o_t3:o_t3 + T3, 3 * S:4 * S].set(m3.T)

    # Species-selection collapse (4S -> n_nu) and lane -> species pattern.
    bsel = jnp.kron(jnp.eye(n_nu, dtype=jnp.float32),
                    jnp.ones((S, 1), jnp.float32))                  # (4S, n_nu)
    lane_species = jnp.tile(jnp.arange(S, dtype=jnp.int32), n_nu)[None, :]

    # --- generation-aware VMEM budget / tile size ---------------------------
    vmem_bytes, n_cores = _device_profile()
    vmem_limit = max(32 << 20, min(vmem_bytes - (16 << 20), 112 << 20))
    vmem_budget = vmem_limit - (8 << 20)

    const_bytes = (feat_itemsize * Fp * 3 * Wgp
                   + 4 * (Wgp * n_nu * S + n_nu * S * n_nu + n_nu * S))
    stream_bytes = Fp * feat_itemsize + 4 + n_nu * 4       # X + species + out
    temp_bytes = 4 * (3 * Wgp + 3 * Wgp + Wgp + 2 * n_nu * S + n_nu)

    if tile_atoms is None:
        tile_atoms = _choose_tile_atoms(N, stream_bytes, temp_bytes, const_bytes,
                                        vmem_budget, n_cores)
    TN = int(tile_atoms)
    assert TN % 128 == 0, "tile_atoms must be a multiple of 128"

    # --- packed per-atom feature stream, built once -------------------------
    # Padded atoms: all-zero features (every energy term multiplies a zeroed
    # feature -> exactly 0) and species 0; bias column is 1 everywhere.
    Npad = _round_up(max(N, TN), TN)
    Xp = jnp.zeros((Npad, Fp), feature_dtype)
    Xp = Xp.at[:N, 0:C].set(comp.astype(feature_dtype))
    Xp = Xp.at[:N, rad_off:rad_off + F_rad].set(rad.astype(feature_dtype))
    col = sph_off
    for blk in sph_flat:
        Xp = Xp.at[:N, col:col + blk.shape[1]].set(blk.astype(feature_dtype))
        col += blk.shape[1]
    Xp = Xp.at[:, bias_col].set(1.0)
    spp = jnp.zeros((Npad, 1), jnp.int32).at[:N, 0].set(
        jnp.asarray(species_idx, jnp.int32))

    kernel = functools.partial(_ace_energy_kernel, group_width=Wgp)
    const_spec = pl.BlockSpec(memory_space=pltpu.MemorySpace.VMEM)

    flops = Npad * (2 * Fp * 3 * Wgp + 2 * Wgp * n_nu * S + 2 * n_nu * S * n_nu)
    bytes_accessed = Npad * stream_bytes + const_bytes

    energies_padded = pl.pallas_call(
        kernel,
        out_shape=jax.ShapeDtypeStruct((Npad, n_nu), jnp.float32),
        grid=(Npad // TN,),
        in_specs=[
            pl.BlockSpec((TN, Fp), lambda i: (i, 0)),   # packed per-atom features
            pl.BlockSpec((TN, 1), lambda i: (i, 0)),    # species index column
            const_spec,                                 # Wbig (single-buffered)
            const_spec,                                 # Mred
            const_spec,                                 # Bsel
            const_spec,                                 # lane -> species pattern
        ],
        out_specs=pl.BlockSpec((TN, n_nu), lambda i: (i, 0)),
        compiler_params=pltpu.CompilerParams(
            dimension_semantics=("parallel",),
            vmem_limit_bytes=int(vmem_limit)),
        cost_estimate=pl.CostEstimate(
            flops=int(flops), transcendentals=0,
            bytes_accessed=int(bytes_accessed)),
    )(Xp, spp, wbig, mred, bsel, lane_species)

    energies = energies_padded[:N]               # (N, n_nu), atoms on sublanes
    total_energy = jnp.sum(energies)
    return total_energy, energies


def _reference_forward(comp, rad, sph_blocks, species_idx,
                       combine_indices, multipliers):
    sph = jnp.concatenate(
        [b.reshape(b.shape[0], -1) for b in sph_blocks], axis=1)
    e0 = jnp.sum(comp, axis=1) * multipliers[0]
    e1 = jnp.sum(rad * multipliers[1][species_idx], axis=1)
    idx2, idx3 = combine_indices[2], combine_indices[3]
    e2 = jnp.sum(sph[:, idx2[:, 0]] * sph[:, idx2[:, 1]]
                 * multipliers[2][species_idx], axis=1)
    e3 = jnp.sum(sph[:, idx3[:, 0]] * sph[:, idx3[:, 1]] * sph[:, idx3[:, 2]]
                 * multipliers[3][species_idx], axis=1)
    energies = jnp.stack([e0, e1, e2, e3], axis=1)
    return jnp.sum(energies), energies


if __name__ == "__main__":
    key = jax.random.PRNGKey(0)
    keys = jax.random.split(key, 12)

    # module hyperparameters (small synthetic sizes)
    all_species = [1, 6, 7, 8]        # H, C, N, O
    S = len(all_species)              # n_species
    N = 200                           # n_atoms (not a multiple of the tile)
    C = S                             # composition features per sample
    F_rad = 32                        # radial-spectrum features
    l_max = 2
    n_per_l = 8                       # radial channels per l
    T2, T3 = 32, 24                   # polyeval terms for nu=2, nu=3
    F_sph = sum((2 * l + 1) * n_per_l for l in range(l_max + 1))

    # species_to_species_index lookup (as in __init__)
    sp_arr = jnp.array(all_species, dtype=jnp.int32)
    species_to_species_index = (
        jnp.zeros(max(all_species) + 1, dtype=jnp.int32)
        .at[sp_arr].set(jnp.arange(S, dtype=jnp.int32)))

    atomic_species = jax.random.choice(keys[0], sp_arr, (N,))
    species_idx = species_to_species_index[atomic_species]

    # synthetic featurizer outputs (stand-ins for the rascaline calculators)
    comp = jax.nn.one_hot(species_idx, C, dtype=jnp.float32)
    rad = jax.random.normal(keys[1], (N, F_rad), jnp.float32)
    sph_blocks = [
        jax.random.normal(keys[2 + l], (N, 2 * l + 1, n_per_l), jnp.float32)
        for l in range(l_max + 1)
    ]

    combine_indices = {
        2: jax.random.randint(keys[6], (T2, 2), 0, F_sph),
        3: jax.random.randint(keys[7], (T3, 3), 0, F_sph),
    }
    multipliers = {
        0: jnp.float32(0.5),
        1: 0.1 * jax.random.normal(keys[8], (S, F_rad), jnp.float32),
        2: 0.1 * jax.random.normal(keys[9], (S, T2), jnp.float32),
        3: 0.1 * jax.random.normal(keys[10], (S, T3), jnp.float32),
    }

    total_energy, energies = ace_evaluator_forward(
        comp, rad, sph_blocks, species_idx, combine_indices, multipliers, S)
    total_energy = jax.block_until_ready(total_energy)

    ref_total, ref_energies = _reference_forward(
        comp, rad, sph_blocks, species_idx, combine_indices, multipliers)

    # bf16 feature/weight stream (f32 accumulation) -> bf16-appropriate tolerances.
    if not jnp.allclose(total_energy, ref_total, rtol=2e-2, atol=1e-1):
        raise AssertionError(
            f"total mismatch: kernel={total_energy} reference={ref_total}")
    if not jnp.allclose(energies, ref_energies, rtol=2e-2, atol=5e-2):
        err = jnp.max(jnp.abs(energies - ref_energies))
        raise AssertionError(f"per-atom energies mismatch: max abs err {err}")

    # TODO(synk): the rascaline feature calculators and metatensor
    # keys_to_samples bookkeeping have no Pallas equivalent; synthetic per-atom
    # feature blocks are used instead.  For production-scale T2/T3 (>> F_sph)
    # on v7x, replace the 0/1 selection columns with in-kernel index gathers to
    # bound the Wbig VMEM/FLOP cost.
    print("KERNEL_OK")
</pallas_src>

<mosaic_0001>
module attributes {stable_mosaic.version = 11 : i64} {
  func.func @_ace_energy_kernel(%arg0: i32, %arg1: memref<128x128xbf16, #tpu.memory_space<vmem>>, %arg2: memref<128x1xi32, #tpu.memory_space<vmem>>, %arg3: memref<128x384xbf16, #tpu.memory_space<vmem>>, %arg4: memref<128x16xf32, #tpu.memory_space<vmem>>, %arg5: memref<16x4xf32, #tpu.memory_space<vmem>>, %arg6: memref<1x16xi32, #tpu.memory_space<vmem>>, %arg7: memref<128x4xf32, #tpu.memory_space<vmem>>) attributes {dimension_semantics = [#tpu.dimension_semantics<parallel>], iteration_bounds = array<i64: 2>, scalar_prefetch = 0 : i64, scratch_operands = 0 : i64, tpu.core_type = #tpu.core_type<tc>, window_params = [{transform_indices = @transform_0, window_bounds = array<i64: 128, 128>}, {transform_indices = @transform_1, window_bounds = array<i64: 128, 1>}, {pipeline_mode = #tpu.pipeline_mode<synchronous>, transform_indices = @transform_2, window_bounds = array<i64: 128, 384>}, {pipeline_mode = #tpu.pipeline_mode<synchronous>, transform_indices = @transform_3, window_bounds = array<i64: 128, 16>}, {pipeline_mode = #tpu.pipeline_mode<synchronous>, transform_indices = @transform_4, window_bounds = array<i64: 16, 4>}, {pipeline_mode = #tpu.pipeline_mode<synchronous>, transform_indices = @transform_5, window_bounds = array<i64: 1, 16>}, {transform_indices = @transform_6, window_bounds = array<i64: 128, 4>}]} {
    %c0 = arith.constant 0 : index
    %c0_0 = arith.constant 0 : index
    %0 = vector.load %arg1[%c0, %c0_0] : memref<128x128xbf16, #tpu.memory_space<vmem>>, vector<128x128xbf16>
    %c0_1 = arith.constant 0 : index
    %c0_2 = arith.constant 0 : index
    %1 = vector.load %arg3[%c0_1, %c0_2] : memref<128x384xbf16, #tpu.memory_space<vmem>>, vector<128x384xbf16>
    %cst = arith.constant dense<0.000000e+00> : vector<128x384xf32>
    %2 = tpu.matmul %0, %1, %cst {dimension_numbers = #tpu.dot_dimension_numbers<[1], [0], [0], [1], [0, 0, 1, 1], [], []>} : vector<128x128xbf16>, vector<128x384xbf16>, vector<128x384xf32> -> vector<128x384xf32>
    %3 = vector.extract_strided_slice %2 {offsets = [0, 0], sizes = [128, 128], strides = [1, 1]} : vector<128x384xf32> to vector<128x128xf32>
    %4 = vector.extract_strided_slice %2 {offsets = [0, 128], sizes = [128, 128], strides = [1, 1]} : vector<128x384xf32> to vector<128x128xf32>
    %5 = vector.extract_strided_slice %2 {offsets = [0, 256], sizes = [128, 128], strides = [1, 1]} : vector<128x384xf32> to vector<128x128xf32>
    %6 = arith.mulf %3, %4 : vector<128x128xf32>
    %7 = arith.mulf %6, %5 : vector<128x128xf32>
    %c0_3 = arith.constant 0 : index
    %c0_4 = arith.constant 0 : index
    %8 = vector.load %arg4[%c0_3, %c0_4] : memref<128x16xf32, #tpu.memory_space<vmem>>, vector<128x16xf32>
    %cst_5 = arith.constant dense<0.000000e+00> : vector<128x16xf32>
    %9 = tpu.matmul %7, %8, %cst_5 {dimension_numbers = #tpu.dot_dimension_numbers<[1], [0], [0], [1], [0, 0, 1, 1], [], []>} : vector<128x128xf32>, vector<128x16xf32>, vector<128x16xf32> -> vector<128x16xf32>
    %c0_6 = arith.constant 0 : index
    %c0_7 = arith.constant 0 : index
    %10 = vector.load %arg6[%c0_6, %c0_7] : memref<1x16xi32, #tpu.memory_space<vmem>>, vector<1x16xi32>
    %c0_8 = arith.constant 0 : index
    %c0_9 = arith.constant 0 : index
    %11 = vector.load %arg2[%c0_8, %c0_9] : memref<128x1xi32, #tpu.memory_space<vmem>>, vector<128x1xi32>
    %12 = vector.broadcast %10 : vector<1x16xi32> to vector<128x16xi32>
    %13 = vector.broadcast %11 : vector<128x1xi32> to vector<128x16xi32>
    %14 = arith.cmpi eq, %12, %13 : vector<128x16xi32>
    %15 = arith.extui %14 : vector<128x16xi1> to vector<128x16xi32>
    %16 = arith.sitofp %15 : vector<128x16xi32> to vector<128x16xf32>
    %17 = arith.mulf %9, %16 : vector<128x16xf32>
    %c0_10 = arith.constant 0 : index
    %c0_11 = arith.constant 0 : index
    %18 = vector.load %arg5[%c0_10, %c0_11] : memref<16x4xf32, #tpu.memory_space<vmem>>, vector<16x4xf32>
    %cst_12 = arith.constant dense<0.000000e+00> : vector<128x4xf32>
    %19 = tpu.matmul %17, %18, %cst_12 {dimension_numbers = #tpu.dot_dimension_numbers<[1], [0], [0], [1], [0, 0, 1, 1], [], []>} : vector<128x16xf32>, vector<16x4xf32>, vector<128x4xf32> -> vector<128x4xf32>
    %c0_13 = arith.constant 0 : index
    %c0_14 = arith.constant 0 : index
    %20 = vector.load %arg7[%c0_13, %c0_14] : memref<128x4xf32, #tpu.memory_space<vmem>>, vector<128x4xf32>
    tpu.vector_store %arg7[%c0_13, %c0_14], %19 {strides = array<i32>} : memref<128x4xf32, #tpu.memory_space<vmem>>, vector<128x4xf32>,
    return
  }
  func.func @transform_0(%arg0: i32) -> (i32, i32) {
    %c0_i32 = arith.constant 0 : i32
    %c0_i32_0 = arith.constant 0 : i32
    return %arg0, %c0_i32 : i32, i32
  }
  func.func @transform_1(%arg0: i32) -> (i32, i32) {
    %c0_i32 = arith.constant 0 : i32
    %c0_i32_0 = arith.constant 0 : i32
    return %arg0, %c0_i32 : i32, i32
  }
  func.func @transform_2(%arg0: i32) -> (i32, i32) {
    %c0_i32 = arith.constant 0 : i32
    %c0_i32_0 = arith.constant 0 : i32
    %c0_i32_1 = arith.constant 0 : i32
    return %c0_i32, %c0_i32_0 : i32, i32
  }
  func.func @transform_3(%arg0: i32) -> (i32, i32) {
    %c0_i32 = arith.constant 0 : i32
    %c0_i32_0 = arith.constant 0 : i32
    %c0_i32_1 = arith.constant 0 : i32
    return %c0_i32, %c0_i32_0 : i32, i32
  }
  func.func @transform_4(%arg0: i32) -> (i32, i32) {
    %c0_i32 = arith.constant 0 : i32
    %c0_i32_0 = arith.constant 0 : i32
    %c0_i32_1 = arith.constant 0 : i32
    return %c0_i32, %c0_i32_0 : i32, i32
  }
  func.func @transform_5(%arg0: i32) -> (i32, i32) {
    %c0_i32 = arith.constant 0 : i32
    %c0_i32_0 = arith.constant 0 : i32
    %c0_i32_1 = arith.constant 0 : i32
    return %c0_i32, %c0_i32_0 : i32, i32
  }
  func.func @transform_6(%arg0: i32) -> (i32, i32) {
    %c0_i32 = arith.constant 0 : i32
    %c0_i32_0 = arith.constant 0 : i32
    return %arg0, %c0_i32 : i32, i32
  }
}

</mosaic_0001>

<llo_original>
// kernel: tpu_custom_call.1
$region0: #{tpu_custom_call.1}
  #allocation0 [shape = 'u32[]', space=smem, size = 0x4, offset = 0x4, fixed_abs, tag = 'smem constant byte address 0x4 - core index']
  #allocation1 [shape = 'u32[144,128]{1,0:T(1,128)}', space=vmem, size = 0x12000, scoped, tag = 'internal scratch']
  %s0 = inlined_call_operand.vmem [shape: bf16[256,128], index: 0, kind: input, shape index: {}]
  %s1 = inlined_call_operand.vmem [shape: s32[256,1], index: 1, kind: input, shape index: {}]
  %s2 = inlined_call_operand.vmem [shape: bf16[128,384], index: 2, kind: input, shape index: {}]
  %s3 = inlined_call_operand.vmem [shape: f32[128,16], index: 3, kind: input, shape index: {}]
  %s4 = inlined_call_operand.vmem [shape: f32[16,4], index: 4, kind: input, shape index: {}]
  %s5 = inlined_call_operand.vmem [shape: s32[1,16], index: 5, kind: input, shape index: {}]
  %s6 = inlined_call_operand.vmem [shape: f32[256,4], index: 6, kind: output, shape index: {}]
  %s7 = sld [smem:[#allocation0]]
  $region57: #{tpu_custom_call.1} parent=0
    _
  %s9 = ssub.s32 1, %s7
  %s10 = scalar_select 0, %s9, %s7
  loop: start=0, step=1, limit=4
  $region2: #{tpu_custom_call.1} parent=0 // loop_pre_header
    _
  $region3: #{tpu_custom_call.1} parent=0 // loop_header
    %s12 = sphi 0, %s16
    %p13 = scmp.ge.s32.totalorder %s12, 4
    %s22 = sphi 0, %s24
    %s25 = sphi 0, %s22
    %s26 = sphi 0, %s25
    %s42 = sphi 0, %s26
    %s48 = sphi 0, %s50
    %s51 = sphi 0, %s48
    %s52 = sphi 0, %s51
    %s68 = sphi 0, %s52
    %s72 = sphi 0, %s72
    %s74 = sphi 0, %s72
    %s75 = sphi 0, %s74
    %s89 = sphi 0, %s75
    %s93 = sphi 0, %s93
    %s95 = sphi 0, %s93
    %s96 = sphi 0, %s95
    %s110 = sphi 0, %s96
    %s114 = sphi 0, %s114
    %s116 = sphi 0, %s114
    %s117 = sphi 0, %s116
    %s131 = sphi 0, %s117
    %s135 = sphi 0, %s135
    %s137 = sphi 0, %s135
    %s138 = sphi 0, %s137
    %s152 = sphi 0, %s138
    %s158 = sphi 0, %s160
    %s161 = sphi 0, %s158
    %s162 = sphi 0, %s161
    %s178 = sphi 0, %s162
  $region4: #{tpu_custom_call.1} parent=0 // loop_header_branch
    %15 = sbr.rel (%p13) target = $region8
  $region5: #{tpu_custom_call.1} parent=0 // loop_body
    %s17 = ssub.s32 %s12, 1
    %s18 = ssub.s32 %s12, 2
    %s19 = sadd.s32 %s12, 1
    %s20 = ssub.s32 %s12, %s19
    %p21 = scmp.eq.s32.totalorder %s20, 0
    %s23 = sadd.s32 %s22, 1
    %s24 = scalar_select %p21, %s22, %s23
    %p27 = pneg %p21
    %p28 = scmp.eq.s32.totalorder %s12, 1
    %p29 = por %p27, %p28
    %p30 = scmp.ne.s32.totalorder %s22, %s25
    %p31 = scmp.eq.s32.totalorder %s12, 0
    %p32 = por %p30, %p31
    %p33 = scmp.ne.s32.totalorder %s22, %s25
    %p34 = scmp.eq.s32.totalorder %s17, 1
    %p35 = por %p33, %p34
    %p36 = scmp.ne.s32.totalorder %s25, %s26
    %p37 = scmp.eq.s32.totalorder %s17, 0
    %p38 = por %p36, %p37
    %p39 = scmp.ne.s32.totalorder %s25, %s26
    %p40 = scmp.eq.s32.totalorder %s18, 1
    %p41 = por %p39, %p40
    %p43 = scmp.ne.s32.totalorder %s26, %s42
    %p44 = scmp.eq.s32.totalorder %s18, 0
    %p45 = por %p43, %p44
    %s46 = ssub.s32 %s12, %s19
    %p47 = scmp.eq.s32.totalorder %s46, 0
    %s49 = sadd.s32 %s48, 1
    %s50 = scalar_select %p47, %s48, %s49
    %p53 = pneg %p47
    %p54 = scmp.eq.s32.totalorder %s12, 1
    %p55 = por %p53, %p54
    %p56 = scmp.ne.s32.totalorder %s48, %s51
    %p57 = scmp.eq.s32.totalorder %s12, 0
    %p58 = por %p56, %p57
    %p59 = scmp.ne.s32.totalorder %s48, %s51
    %p60 = scmp.eq.s32.totalorder %s17, 1
    %p61 = por %p59, %p60
    %p62 = scmp.ne.s32.totalorder %s51, %s52
    %p63 = scmp.eq.s32.totalorder %s17, 0
    %p64 = por %p62, %p63
    %p65 = scmp.ne.s32.totalorder %s51, %s52
    %p66 = scmp.eq.s32.totalorder %s18, 1
    %p67 = por %p65, %p66
    %p69 = scmp.ne.s32.totalorder %s52, %s68
    %p70 = scmp.eq.s32.totalorder %s18, 0
    %p71 = por %p69, %p70
    %s73 = sadd.s32 %s72, 1
    %p76 = scmp.eq.s32.totalorder %s12, 1
    %p77 = scmp.ne.s32.totalorder %s72, %s74
    %p78 = scmp.eq.s32.totalorder %s12, 0
    %p79 = por %p77, %p78
    %p80 = scmp.ne.s32.totalorder %s72, %s74
    %p81 = scmp.eq.s32.totalorder %s17, 1
    %p82 = por %p80, %p81
    %p83 = scmp.ne.s32.totalorder %s74, %s75
    %p84 = scmp.eq.s32.totalorder %s17, 0
    %p85 = por %p83, %p84
    %p86 = scmp.ne.s32.totalorder %s74, %s75
    %p87 = scmp.eq.s32.totalorder %s18, 1
    %p88 = por %p86, %p87
    %p90 = scmp.ne.s32.totalorder %s75, %s89
    %p91 = scmp.eq.s32.totalorder %s18, 0
    %p92 = por %p90, %p91
    %s94 = sadd.s32 %s93, 1
    %p97 = scmp.eq.s32.totalorder %s12, 1
    %p98 = scmp.ne.s32.totalorder %s93, %s95
    %p99 = scmp.eq.s32.totalorder %s12, 0
    %p100 = por %p98, %p99
    %p101 = scmp.ne.s32.totalorder %s93, %s95
    %p102 = scmp.eq.s32.totalorder %s17, 1
    %p103 = por %p101, %p102
    %p104 = scmp.ne.s32.totalorder %s95, %s96
    %p105 = scmp.eq.s32.totalorder %s17, 0
    %p106 = por %p104, %p105
    %p107 = scmp.ne.s32.totalorder %s95, %s96
    %p108 = scmp.eq.s32.totalorder %s18, 1
    %p109 = por %p107, %p108
    %p111 = scmp.ne.s32.totalorder %s96, %s110
    %p112 = scmp.eq.s32.totalorder %s18, 0
    %p113 = por %p111, %p112
    %s115 = sadd.s32 %s114, 1
    %p118 = scmp.eq.s32.totalorder %s12, 1
    %p119 = scmp.ne.s32.totalorder %s114, %s116
    %p120 = scmp.eq.s32.totalorder %s12, 0
    %p121 = por %p119, %p120
    %p122 = scmp.ne.s32.totalorder %s114, %s116
    %p123 = scmp.eq.s32.totalorder %s17, 1
    %p124 = por %p122, %p123
    %p125 = scmp.ne.s32.totalorder %s116, %s117
    %p126 = scmp.eq.s32.totalorder %s17, 0
    %p127 = por %p125, %p126
    %p128 = scmp.ne.s32.totalorder %s116, %s117
    %p129 = scmp.eq.s32.totalorder %s18, 1
    %p130 = por %p128, %p129
    %p132 = scmp.ne.s32.totalorder %s117, %s131
    %p133 = scmp.eq.s32.totalorder %s18, 0
    %p134 = por %p132, %p133
    %s136 = sadd.s32 %s135, 1
    %p139 = scmp.eq.s32.totalorder %s12, 1
    %p140 = scmp.ne.s32.totalorder %s135, %s137
    %p141 = scmp.eq.s32.totalorder %s12, 0
    %p142 = por %p140, %p141
    %p143 = scmp.ne.s32.totalorder %s135, %s137
    %p144 = scmp.eq.s32.totalorder %s17, 1
    %p145 = por %p143, %p144
    %p146 = scmp.ne.s32.totalorder %s137, %s138
    %p147 = scmp.eq.s32.totalorder %s17, 0
    %p148 = por %p146, %p147
    %p149 = scmp.ne.s32.totalorder %s137, %s138
    %p150 = scmp.eq.s32.totalorder %s18, 1
    %p151 = por %p149, %p150
    %p153 = scmp.ne.s32.totalorder %s138, %s152
    %p154 = scmp.eq.s32.totalorder %s18, 0
    %p155 = por %p153, %p154
    %s156 = ssub.s32 %s12, %s19
    %p157 = scmp.eq.s32.totalorder %s156, 0
    %s159 = sadd.s32 %s158, 1
    %s160 = scalar_select %p157, %s158, %s159
    %p163 = pneg %p157
    %p164 = scmp.eq.s32.totalorder %s12, 1
    %p165 = por %p163, %p164
    %p166 = scmp.ne.s32.totalorder %s158, %s161
    %p167 = scmp.eq.s32.totalorder %s12, 0
    %p168 = por %p166, %p167
    %p169 = scmp.ne.s32.totalorder %s158, %s161
    %p170 = scmp.eq.s32.totalorder %s17, 1
    %p171 = por %p169, %p170
    %p172 = scmp.ne.s32.totalorder %s161, %s162
    %p173 = scmp.eq.s32.totalorder %s17, 0
    %p174 = por %p172, %p173
    %p175 = scmp.ne.s32.totalorder %s161, %s162
    %p176 = scmp.eq.s32.totalorder %s18, 1
    %p177 = por %p175, %p176
    %p179 = scmp.ne.s32.totalorder %s162, %s178
    %p180 = scmp.eq.s32.totalorder %s18, 0
    %p181 = por %p179, %p180
    %p182 = scmp.le.s32.totalorder 1, %s12
    %p183 = scmp.lt.s32.totalorder %s12, 3
    %p184 = pnand %p182, %p183
    %p185 = pneg %p184
    // Predicated region
    $region9: #{tpu_custom_call.1} parent=5 // pred_check
      _
    $region10: #{tpu_custom_call.1} parent=5 // pred_check_branch
      %187 = sbr.rel (%p184) target = $region12
    $region11: #{tpu_custom_call.1} parent=5 // pred_region
      %s188 = ssub.s32 %s12, 1
      // Predicated region
      $region13: #{tpu_custom_call.1} parent=11 // pred_check
        %p189 = pneg %p85
      $region14: #{tpu_custom_call.1} parent=11 // pred_check_branch
        %191 = sbr.rel (%p189) target = $region16
      $region15: #{tpu_custom_call.1} parent=11 // pred_region
        _
      $region16: #{tpu_custom_call.1} parent=11 // pred_fallthru
        _
      // Predicated region
      $region17: #{tpu_custom_call.1} parent=11 // pred_check
        %p192 = pneg %p106
      $region18: #{tpu_custom_call.1} parent=11 // pred_check_branch
        %194 = sbr.rel (%p192) target = $region20
      $region19: #{tpu_custom_call.1} parent=11 // pred_region
        _
      $region20: #{tpu_custom_call.1} parent=11 // pred_fallthru
        _
      // Predicated region
      $region21: #{tpu_custom_call.1} parent=11 // pred_check
        %p195 = pneg %p127
      $region22: #{tpu_custom_call.1} parent=11 // pred_check_branch
        %197 = sbr.rel (%p195) target = $region24
      $region23: #{tpu_custom_call.1} parent=11 // pred_region
        _
      $region24: #{tpu_custom_call.1} parent=11 // pred_fallthru
        _
      // Predicated region
      $region25: #{tpu_custom_call.1} parent=11 // pred_check
        %p198 = pneg %p148
      $region26: #{tpu_custom_call.1} parent=11 // pred_check_branch
        %200 = sbr.rel (%p198) target = $region28
      $region27: #{tpu_custom_call.1} parent=11 // pred_region
        _
      $region28: #{tpu_custom_call.1} parent=11 // pred_fallthru
        _
    $region12: #{tpu_custom_call.1} parent=5 // pred_fallthru
      _
    %p201 = scmp.lt.s32.totalorder %s12, 2
    // Predicated region
    $region29: #{tpu_custom_call.1} parent=5 // pred_check
      %p202 = pneg %p201
    $region30: #{tpu_custom_call.1} parent=5 // pred_check_branch
      %204 = sbr.rel (%p202) target = $region32
    $region31: #{tpu_custom_call.1} parent=5 // pred_region
      // Predicated region
      $region33: #{tpu_custom_call.1} parent=31 // pred_check
        %p205 = pneg %p32
      $region34: #{tpu_custom_call.1} parent=31 // pred_check_branch
        %207 = sbr.rel (%p205) target = $region36
      $region35: #{tpu_custom_call.1} parent=31 // pred_region
        %s208 = smul.u32 16, %s12
        %p209 = scmp.lt.s32.totalorder %s208, 31
        %s210 = scalar_select %p209, %s208, 31
        %s211 = smul.addr %s210, 4
        %s212 = scalar_lea.vmem %s0, %s211
        %s213 = smul.u32 16, %s12
      $region36: #{tpu_custom_call.1} parent=31 // pred_fallthru
        _
      // Predicated region
      $region37: #{tpu_custom_call.1} parent=31 // pred_check
        %p214 = pneg %p58
      $region38: #{tpu_custom_call.1} parent=31 // pred_check_branch
        %216 = sbr.rel (%p214) target = $region40
      $region39: #{tpu_custom_call.1} parent=31 // pred_region
        %s217 = smul.u32 16, %s12
        %p218 = scmp.lt.s32.totalorder %s217, 31
        %s219 = scalar_select %p218, %s217, 31
        %s220 = smul.addr %s219, 8
        %s221 = scalar_lea.vmem %s1, %s220
        %s222 = smul.u32 16, %s12
      $region40: #{tpu_custom_call.1} parent=31 // pred_fallthru
        _
    $region32: #{tpu_custom_call.1} parent=5 // pred_fallthru
      _
    %p223 = scmp.le.s32.totalorder 1, %s12
    %p224 = scmp.lt.s32.totalorder %s12, 3
    %p225 = pnand %p223, %p224
    %p226 = pneg %p225
    // Predicated region
    $region41: #{tpu_custom_call.1} parent=5 // pred_check
      _
    $region42: #{tpu_custom_call.1} parent=5 // pred_check_branch
      %228 = sbr.rel (%p225) target = $region44
    $region43: #{tpu_custom_call.1} parent=5 // pred_region
      %s229 = ssub.s32 %s12, 1
      %s230 = smul.u32 16, %s17
      %p231 = scmp.lt.s32.totalorder %s230, 31
      %s232 = scalar_select %p231, %s230, 31
      %s233 = smul.addr %s232, 4
      %s234 = scalar_lea.vmem %s0, %s233
      %p235 = pneg %p38
      %p236 = pneg %p35
      %s237 = smul.u32 16, %s17
      %p238 = scmp.lt.s32.totalorder %s237, 31
      %s239 = scalar_select %p238, %s237, 31
      %s240 = smul.addr %s239, 8
      %s241 = scalar_lea.vmem %s1, %s240
      %p242 = pneg %p64
      %p243 = pneg %p61
      %p244 = pneg %p85
      %p245 = pneg %p82
      %p246 = pneg %p106
      %p247 = pneg %p103
      %p248 = pneg %p127
      %p249 = pneg %p124
      %p250 = pneg %p148
      %p251 = pneg %p145
      %p252 = pneg %p174
      %p253 = pneg %p171
      %s254 = smul.u32 16, %s17
      %p255 = scmp.lt.s32.totalorder %s254, 31
      %s256 = scalar_select %p255, %s254, 31
      %s257 = smul.addr %s256, 8
      %s258 = scalar_lea.vmem %s6, %s257
      %s259 = smul.u32 16, %s17
      %p260 = scmp.lt.s32.totalorder %s259, 31
      %s261 = scalar_select %p260, %s259, 31
      %s262 = smul.addr %s261, 4
      %s263 = scalar_lea.vmem %s0, %s262
      %s264 = smul.u32 16, %s17
      %s265 = smul.u32 16, %s17
      %p266 = scmp.lt.s32.totalorder %s265, 31
      %s267 = scalar_select %p266, %s265, 31
      %s268 = smul.addr %s267, 8
      %s269 = scalar_lea.vmem %s1, %s268
      %s270 = smul.u32 16, %s17
      %s271 = smul.u32 16, %s17
      %p272 = scmp.lt.s32.totalorder %s271, 31
      %s273 = scalar_select %p272, %s271, 31
      %s274 = smul.addr %s273, 8
      %s275 = scalar_lea.vmem %s6, %s274
      %s276 = smul.u32 16, %s17
      %v278 = vld [vmem:[%s263] sm:$0xf]
      %v279 = vld [vmem:[%s263 + $0x4] sm:$0xf]
      %v280 = vld [vmem:[%s263 + $0x8] sm:$0xf]
      %v281 = vld [vmem:[%s263 + $0xc] sm:$0xf]
      %v282 = vld [vmem:[%s263 + $0x10] sm:$0xf]
      %v283 = vld [vmem:[%s263 + $0x14] sm:$0xf]
      %v284 = vld [vmem:[%s263 + $0x18] sm:$0xf]
      %v285 = vld [vmem:[%s263 + $0x1c] sm:$0xf]
      %v286 = vld [vmem:[%s263 + $0x20] sm:$0xf]
      %v287 = vld [vmem:[%s263 + $0x24] sm:$0xf]
      %v288 = vld [vmem:[%s263 + $0x28] sm:$0xf]
      %v289 = vld [vmem:[%s263 + $0x2c] sm:$0xf]
      %v290 = vld [vmem:[%s263 + $0x30] sm:$0xf]
      %v291 = vld [vmem:[%s263 + $0x34] sm:$0xf]
      %v292 = vld [vmem:[%s263 + $0x38] sm:$0xf]
      %v293 = vld [vmem:[%s263 + $0x3c] sm:$0xf]
      %v294 = vld [vmem:[%s2] sm:$0xff]
      %v295 = vld [vmem:[%s2 + $0x8] sm:$0xf]
      %v296 = vld [vmem:[%s2 + $0xc] sm:$0xff]
      %v297 = vld [vmem:[%s2 + $0x14] sm:$0xf]
      %v298 = vld [vmem:[%s2 + $0x18] sm:$0xff]
      %v299 = vld [vmem:[%s2 + $0x20] sm:$0xf]
      %v300 = vld [vmem:[%s2 + $0x24] sm:$0xff]
      %v301 = vld [vmem:[%s2 + $0x2c] sm:$0xf]
      %v302 = vld [vmem:[%s2 + $0x30] sm:$0xff]
      %v303 = vld [vmem:[%s2 + $0x38] sm:$0xf]
      %v304 = vld [vmem:[%s2 + $0x3c] sm:$0xff]
      %v305 = vld [vmem:[%s2 + $0x44] sm:$0xf]
      %v306 = vld [vmem:[%s2 + $0x48] sm:$0xff]
      %v307 = vld [vmem:[%s2 + $0x50] sm:$0xf]
      %v308 = vld [vmem:[%s2 + $0x54] sm:$0xff]
      %v309 = vld [vmem:[%s2 + $0x5c] sm:$0xf]
      %v310 = vld [vmem:[%s2 + $0x60] sm:$0xff]
      %v311 = vld [vmem:[%s2 + $0x68] sm:$0xf]
      %v312 = vld [vmem:[%s2 + $0x6c] sm:$0xff]
      %v313 = vld [vmem:[%s2 + $0x74] sm:$0xf]
      %v314 = vld [vmem:[%s2 + $0x78] sm:$0xff]
      %v315 = vld [vmem:[%s2 + $0x80] sm:$0xf]
      %v316 = vld [vmem:[%s2 + $0x84] sm:$0xff]
      %v317 = vld [vmem:[%s2 + $0x8c] sm:$0xf]
      %v318 = vld [vmem:[%s2 + $0x90] sm:$0xff]
      %v319 = vld [vmem:[%s2 + $0x98] sm:$0xf]
      %v320 = vld [vmem:[%s2 + $0x9c] sm:$0xff]
      %v321 = vld [vmem:[%s2 + $0xa4] sm:$0xf]
      %v322 = vld [vmem:[%s2 + $0xa8] sm:$0xff]
      %v323 = vld [vmem:[%s2 + $0xb0] sm:$0xf]
      %v324 = vld [vmem:[%s2 + $0xb4] sm:$0xff]
      %v325 = vld [vmem:[%s2 + $0xbc] sm:$0xf]
      %v342 = vunpack.c.l.b16 %v278
      %v343 = vunpack.c.l.b16 %v279
      %v344 = vunpack.c.l.b16 %v280
      %v345 = vunpack.c.l.b16 %v281
      %v346 = vunpack.c.l.b16 %v282
      %v347 = vunpack.c.l.b16 %v283
      %v348 = vunpack.c.l.b16 %v284
      %v349 = vunpack.c.l.b16 %v285
      %v350 = vunpack.c.l.b16 %v286
      %v351 = vunpack.c.l.b16 %v287
      %v352 = vunpack.c.l.b16 %v288
      %v353 = vunpack.c.l.b16 %v289
      %v354 = vunpack.c.l.b16 %v290
      %v355 = vunpack.c.l.b16 %v291
      %v356 = vunpack.c.l.b16 %v292
      %v357 = vunpack.c.l.b16 %v293
      %v358 = vpack.c.b16 %v343, %v342
      %v359 = vpack.c.b16 %v345, %v344
      %v360 = vpack.c.b16 %v347, %v346
      %v361 = vpack.c.b16 %v349, %v348
      %v362 = vpack.c.b16 %v351, %v350
      %v363 = vpack.c.b16 %v353, %v352
      %v364 = vpack.c.b16 %v355, %v354
      %v365 = vpack.c.b16 %v357, %v356
      %v406 = vunpack.c.l.b16 %v294
      %v407 = vunpack.c.h.b16 %v294
      %v408 = vunpack.c.l.b16 %v295
      %v409 = vunpack.c.l.b16 %v296
      %v410 = vunpack.c.h.b16 %v296
      %v411 = vunpack.c.l.b16 %v297
      %v412 = vunpack.c.l.b16 %v298
      %v413 = vunpack.c.h.b16 %v298
      %v414 = vunpack.c.l.b16 %v299
      %v415 = vunpack.c.l.b16 %v300
      %v416 = vunpack.c.h.b16 %v300
      %v417 = vunpack.c.l.b16 %v301
      %v418 = vunpack.c.l.b16 %v302
      %v419 = vunpack.c.h.b16 %v302
      %v420 = vunpack.c.l.b16 %v303
      %v421 = vunpack.c.l.b16 %v304
      %v422 = vunpack.c.h.b16 %v304
      %v423 = vunpack.c.l.b16 %v305
      %v424 = vunpack.c.l.b16 %v306
      %v425 = vunpack.c.h.b16 %v306
      %v426 = vunpack.c.l.b16 %v307
      %v427 = vunpack.c.l.b16 %v308
      %v428 = vunpack.c.h.b16 %v308
      %v429 = vunpack.c.l.b16 %v309
      %v430 = vunpack.c.l.b16 %v310
      %v431 = vunpack.c.h.b16 %v310
      %v432 = vunpack.c.l.b16 %v311
      %v433 = vunpack.c.l.b16 %v312
      %v434 = vunpack.c.h.b16 %v312
      %v435 = vunpack.c.l.b16 %v313
      %v436 = vunpack.c.l.b16 %v314
      %v437 = vunpack.c.h.b16 %v314
      %v438 = vunpack.c.l.b16 %v315
      %v439 = vunpack.c.l.b16 %v316
      %v440 = vunpack.c.h.b16 %v316
      %v441 = vunpack.c.l.b16 %v317
      %v442 = vunpack.c.l.b16 %v318
      %v443 = vunpack.c.h.b16 %v318
      %v444 = vunpack.c.l.b16 %v319
      %v445 = vunpack.c.l.b16 %v320
      %v446 = vunpack.c.h.b16 %v320
      %v447 = vunpack.c.l.b16 %v321
      %v448 = vunpack.c.l.b16 %v322
      %v449 = vunpack.c.h.b16 %v322
      %v450 = vunpack.c.l.b16 %v323
      %v451 = vunpack.c.l.b16 %v324
      %v452 = vunpack.c.h.b16 %v324
      %v453 = vunpack.c.l.b16 %v325
      %v454 = vpack.c.b16 %v409, %v406
      %v455 = vpack.c.b16 %v410, %v407
      %v456 = vpack.c.b16 %v411, %v408
      %v457 = vpack.c.b16 %v415, %v412
      %v458 = vpack.c.b16 %v416, %v413
      %v459 = vpack.c.b16 %v417, %v414
      %v460 = vpack.c.b16 %v421, %v418
      %v461 = vpack.c.b16 %v422, %v419
      %v462 = vpack.c.b16 %v423, %v420
      %v463 = vpack.c.b16 %v427, %v424
      %v464 = vpack.c.b16 %v428, %v425
      %v465 = vpack.c.b16 %v429, %v426
      %v466 = vpack.c.b16 %v433, %v430
      %v467 = vpack.c.b16 %v434, %v431
      %v468 = vpack.c.b16 %v435, %v432
      %v469 = vpack.c.b16 %v439, %v436
      %v470 = vpack.c.b16 %v440, %v437
      %v471 = vpack.c.b16 %v441, %v438
      %v472 = vpack.c.b16 %v445, %v442
      %v473 = vpack.c.b16 %v446, %v443
      %v474 = vpack.c.b16 %v447, %v444
      %v475 = vpack.c.b16 %v451, %v448
      %v476 = vpack.c.b16 %v452, %v449
      %v477 = vpack.c.b16 %v453, %v450
      %502 = vmatprep.subr.bf16.mxu0 %v455
      %503 = vmatpush1.bf16.msra.mxu0 %v454
      %504 = vmatprep.subr.bf16.mxu0 %v458
      %505 = vmatpush1.bf16.msra.mxu0 %v457
      %506 = vmatprep.subr.bf16.mxu0 %v461
      %507 = vmatpush1.bf16.msra.mxu0 %v460
      %508 = vmatprep.subr.bf16.mxu0 %v464
      %509 = vmatpush1.bf16.msra.mxu0 %v463
      %510 = vmatprep.subr.bf16.mxu0 %v467
      %511 = vmatpush1.bf16.msra.mxu0 %v466
      %512 = vmatprep.subr.bf16.mxu0 %v470
      %513 = vmatpush1.bf16.msra.mxu0 %v469
      %514 = vmatprep.subr.bf16.mxu0 %v473
      %515 = vmatpush1.bf16.msra.mxu0 %v472
      %516 = vmatprep.subr.bf16.mxu0 %v476
      %517 = vmatpush1.bf16.msra.mxu0 %v475
      %518 = vmatprep.subr.bf16.mxu0 0
      %519 = vmatpush1.bf16.msra.mxu0 0
      %520 = vmatprep.subr.bf16.mxu0 0
      %521 = vmatpush1.bf16.msra.mxu0 0
      %522 = vmatprep.subr.bf16.mxu0 0
      %523 = vmatpush1.bf16.msra.mxu0 0
      %524 = vmatprep.subr.bf16.mxu0 0
      %525 = vmatpush1.bf16.msra.mxu0 0
      %526 = vmatprep.subr.bf16.mxu0 0
      %527 = vmatpush1.bf16.msra.mxu0 0
      %528 = vmatprep.subr.bf16.mxu0 0
      %529 = vmatpush1.bf16.msra.mxu0 0
      %530 = vmatprep.subr.bf16.mxu0 0
      %531 = vmatpush1.bf16.msra.mxu0 0
      %532 = vmatprep.subr.bf16.mxu0 0
      %533 = vmatpush1.bf16.msra.mxu0 0
      %534 = vmatprep.mubr.bf16.mxu0 0
      %535 = vmatmul.mubr.bf16.gmra.mrb[0].mxu0 %v358
      %v536 = vpop.f32.mrb[0].mxu0
      %v537 = vadd.f32 0.0, %v536
      %v538 = vpop.f32.mrb[0].mxu0
      %v539 = vadd.f32 0.0, %v538
      %v540 = vpop.f32.mrb[0].mxu0
      %v541 = vadd.f32 0.0, %v540
      %v542 = vpop.f32.mrb[0].mxu0
      %v543 = vadd.f32 0.0, %v542
      %544 = vmatprep.mubr.bf16.mxu0 0
      %545 = vmatmul.mubr.bf16.gmra.mrb[0].mxu0 %v359
      %v546 = vpop.f32.mrb[0].mxu0
      %v547 = vadd.f32 0.0, %v546
      %v548 = vpop.f32.mrb[0].mxu0
      %v549 = vadd.f32 0.0, %v548
      %v550 = vpop.f32.mrb[0].mxu0
      %v551 = vadd.f32 0.0, %v550
      %v552 = vpop.f32.mrb[0].mxu0
      %v553 = vadd.f32 0.0, %v552
      %554 = vmatprep.mubr.bf16.mxu0 0
      %555 = vmatmul.mubr.bf16.gmra.mrb[0].mxu0 %v360
      %v556 = vpop.f32.mrb[0].mxu0
      %v557 = vadd.f32 0.0, %v556
      %v558 = vpop.f32.mrb[0].mxu0
      %v559 = vadd.f32 0.0, %v558
      %v560 = vpop.f32.mrb[0].mxu0
      %v561 = vadd.f32 0.0, %v560
      %v562 = vpop.f32.mrb[0].mxu0
      %v563 = vadd.f32 0.0, %v562
      %564 = vmatprep.mubr.bf16.mxu0 0
      %565 = vmatmul.mubr.bf16.gmra.mrb[0].mxu0 %v361
      %v566 = vpop.f32.mrb[0].mxu0
      %v567 = vadd.f32 0.0, %v566
      %v568 = vpop.f32.mrb[0].mxu0
      %v569 = vadd.f32 0.0, %v568
      %v570 = vpop.f32.mrb[0].mxu0
      %v571 = vadd.f32 0.0, %v570
      %v572 = vpop.f32.mrb[0].mxu0
      %v573 = vadd.f32 0.0, %v572
      %574 = vmatprep.mubr.bf16.mxu0 0
      %575 = vmatmul.mubr.bf16.gmra.mrb[0].mxu0 %v362
      %v576 = vpop.f32.mrb[0].mxu0
      %v577 = vadd.f32 0.0, %v576
      %v578 = vpop.f32.mrb[0].mxu0
      %v579 = vadd.f32 0.0, %v578
      %v580 = vpop.f32.mrb[0].mxu0
      %v581 = vadd.f32 0.0, %v580
      %v582 = vpop.f32.mrb[0].mxu0
      %v583 = vadd.f32 0.0, %v582
      %584 = vmatprep.mubr.bf16.mxu0 0
      %585 = vmatmul.mubr.bf16.gmra.mrb[0].mxu0 %v363
      %v586 = vpop.f32.mrb[0].mxu0
      %v587 = vadd.f32 0.0, %v586
      %v588 = vpop.f32.mrb[0].mxu0
      %v589 = vadd.f32 0.0, %v588
      %v590 = vpop.f32.mrb[0].mxu0
      %v591 = vadd.f32 0.0, %v590
      %v592 = vpop.f32.mrb[0].mxu0
      %v593 = vadd.f32 0.0, %v592
      %594 = vmatprep.mubr.bf16.mxu0 0
      %595 = vmatmul.mubr.bf16.gmra.mrb[0].mxu0 %v364
      %v596 = vpop.f32.mrb[0].mxu0
      %v597 = vadd.f32 0.0, %v596
      %v598 = vpop.f32.mrb[0].mxu0
      %v599 = vadd.f32 0.0, %v598
      %v600 = vpop.f32.mrb[0].mxu0
      %v601 = vadd.f32 0.0, %v600
      %v602 = vpop.f32.mrb[0].mxu0
      %v603 = vadd.f32 0.0, %v602
      %604 = vmatprep.mubr.bf16.mxu0 0
      %605 = vmatmul.mubr.bf16.gmra.mrb[0].mxu0 %v365
      %v606 = vpop.f32.mrb[0].mxu0
      %v607 = vadd.f32 0.0, %v606
      %v608 = vpop.f32.mrb[0].mxu0
      %v609 = vadd.f32 0.0, %v608
      %v610 = vpop.f32.mrb[0].mxu0
      %v611 = vadd.f32 0.0, %v610
      %v612 = vpop.f32.mrb[0].mxu0
      %v613 = vadd.f32 0.0, %v612
      %614 = vdwg.mxu0
      %615 = vmatprep.subr.bf16.mxu0 0
      %616 = vmatpush1.bf16.msra.mxu0 %v456
      %617 = vmatprep.subr.bf16.mxu0 0
      %618 = vmatpush1.bf16.msra.mxu0 %v459
      %619 = vmatprep.subr.bf16.mxu0 0
      %620 = vmatpush1.bf16.msra.mxu0 %v462
      %621 = vmatprep.subr.bf16.mxu0 0
      %622 = vmatpush1.bf16.msra.mxu0 %v465
      %623 = vmatprep.subr.bf16.mxu0 0
      %624 = vmatpush1.bf16.msra.mxu0 %v468
      %625 = vmatprep.subr.bf16.mxu0 0
      %626 = vmatpush1.bf16.msra.mxu0 %v471
      %627 = vmatprep.subr.bf16.mxu0 0
      %628 = vmatpush1.bf16.msra.mxu0 %v474
      %629 = vmatprep.subr.bf16.mxu0 0
      %630 = vmatpush1.bf16.msra.mxu0 %v477
      %631 = vmatprep.subr.bf16.mxu0 0
      %632 = vmatpush1.bf16.msra.mxu0 0
      %633 = vmatprep.subr.bf16.mxu0 0
      %634 = vmatpush1.bf16.msra.mxu0 0
      %635 = vmatprep.subr.bf16.mxu0 0
      %636 = vmatpush1.bf16.msra.mxu0 0
      %637 = vmatprep.subr.bf16.mxu0 0
      %638 = vmatpush1.bf16.msra.mxu0 0
      %639 = vmatprep.subr.bf16.mxu0 0
      %640 = vmatpush1.bf16.msra.mxu0 0
      %641 = vmatprep.subr.bf16.mxu0 0
      %642 = vmatpush1.bf16.msra.mxu0 0
      %643 = vmatprep.subr.bf16.mxu0 0
      %644 = vmatpush1.bf16.msra.mxu0 0
      %645 = vmatprep.subr.bf16.mxu0 0
      %646 = vmatpush1.bf16.msra.mxu0 0
      %647 = vmatprep.mubr.bf16.mxu0 0
      %648 = vmatmul.mubr.bf16.gmra.mrb[0].mxu0 %v358
      %v649 = vpop.f32.mrb[0].mxu0
      %v650 = vadd.f32 0.0, %v649
      %v651 = vpop.f32.mrb[0].mxu0
      %v652 = vpop.f32.mrb[0].mxu0
      %v653 = vadd.f32 0.0, %v652
      %v654 = vpop.f32.mrb[0].mxu0
      %655 = vmatprep.mubr.bf16.mxu0 0
      %656 = vmatmul.mubr.bf16.gmra.mrb[0].mxu0 %v359
      %v657 = vpop.f32.mrb[0].mxu0
      %v658 = vadd.f32 0.0, %v657
      %v659 = vpop.f32.mrb[0].mxu0
      %v660 = vpop.f32.mrb[0].mxu0
      %v661 = vadd.f32 0.0, %v660
      %v662 = vpop.f32.mrb[0].mxu0
      %663 = vmatprep.mubr.bf16.mxu0 0
      %664 = vmatmul.mubr.bf16.gmra.mrb[0].mxu0 %v360
      %v665 = vpop.f32.mrb[0].mxu0
      %v666 = vadd.f32 0.0, %v665
      %v667 = vpop.f32.mrb[0].mxu0
      %v668 = vpop.f32.mrb[0].mxu0
      %v669 = vadd.f32 0.0, %v668
      %v670 = vpop.f32.mrb[0].mxu0
      %671 = vmatprep.mubr.bf16.mxu0 0
      %672 = vmatmul.mubr.bf16.gmra.mrb[0].mxu0 %v361
      %v673 = vpop.f32.mrb[0].mxu0
      %v674 = vadd.f32 0.0, %v673
      %v675 = vpop.f32.mrb[0].mxu0
      %v676 = vpop.f32.mrb[0].mxu0
      %v677 = vadd.f32 0.0, %v676
      %v678 = vpop.f32.mrb[0].mxu0
      %679 = vmatprep.mubr.bf16.mxu0 0
      %680 = vmatmul.mubr.bf16.gmra.mrb[0].mxu0 %v362
      %v681 = vpop.f32.mrb[0].mxu0
      %v682 = vadd.f32 0.0, %v681
      %v683 = vpop.f32.mrb[0].mxu0
      %v684 = vpop.f32.mrb[0].mxu0
      %v685 = vadd.f32 0.0, %v684
      %v686 = vpop.f32.mrb[0].mxu0
      %687 = vmatprep.mubr.bf16.mxu0 0
      %688 = vmatmul.mubr.bf16.gmra.mrb[0].mxu0 %v363
      %v689 = vpop.f32.mrb[0].mxu0
      %v690 = vadd.f32 0.0, %v689
      %v691 = vpop.f32.mrb[0].mxu0
      %v692 = vpop.f32.mrb[0].mxu0
      %v693 = vadd.f32 0.0, %v692
      %v694 = vpop.f32.mrb[0].mxu0
      %695 = vmatprep.mubr.bf16.mxu0 0
      %696 = vmatmul.mubr.bf16.gmra.mrb[0].mxu0 %v364
      %v697 = vpop.f32.mrb[0].mxu0
      %v698 = vadd.f32 0.0, %v697
      %v699 = vpop.f32.mrb[0].mxu0
      %v700 = vpop.f32.mrb[0].mxu0
      %v701 = vadd.f32 0.0, %v700
      %v702 = vpop.f32.mrb[0].mxu0
      %703 = vmatprep.mubr.bf16.mxu0 0
      %704 = vmatmul.mubr.bf16.gmra.mrb[0].mxu0 %v365
      %v705 = vpop.f32.mrb[0].mxu0
      %v706 = vadd.f32 0.0, %v705
      %v707 = vpop.f32.mrb[0].mxu0
      %v708 = vpop.f32.mrb[0].mxu0
      %v709 = vadd.f32 0.0, %v708
      %v710 = vpop.f32.mrb[0].mxu0
      %711 = vdwg.mxu0
      %v712 = vmul.f32 %v537, %v539
      %v713 = vmul.f32 %v541, %v543
      %v714 = vmul.f32 %v547, %v549
      %v715 = vmul.f32 %v551, %v553
      %v716 = vmul.f32 %v557, %v559
      %v717 = vmul.f32 %v561, %v563
      %v718 = vmul.f32 %v567, %v569
      %v719 = vmul.f32 %v571, %v573
      %v720 = vmul.f32 %v577, %v579
      %v721 = vmul.f32 %v581, %v583
      %v722 = vmul.f32 %v587, %v589
      %v723 = vmul.f32 %v591, %v593
      %v724 = vmul.f32 %v597, %v599
      %v725 = vmul.f32 %v601, %v603
      %v726 = vmul.f32 %v607, %v609
      %v727 = vmul.f32 %v611, %v613
      %v728 = vmul.f32 %v712, %v650
      %v729 = vmul.f32 %v713, %v653
      %v730 = vmul.f32 %v714, %v658
      %v731 = vmul.f32 %v715, %v661
      %v732 = vmul.f32 %v716, %v666
      %v733 = vmul.f32 %v717, %v669
      %v734 = vmul.f32 %v718, %v674
      %v735 = vmul.f32 %v719, %v677
      %v736 = vmul.f32 %v720, %v682
      %v737 = vmul.f32 %v721, %v685
      %v738 = vmul.f32 %v722, %v690
      %v739 = vmul.f32 %v723, %v693
      %v740 = vmul.f32 %v724, %v698
      %v741 = vmul.f32 %v725, %v701
      %v742 = vmul.f32 %v726, %v706
      %v743 = vmul.f32 %v727, %v709
      %v744 = vld [vmem:[%s3] sm:$0xff]
      %v745 = vld [vmem:[%s3 + $0x8] sm:$0xff]
      %v746 = vld [vmem:[%s3 + $0x10] sm:$0xff]
      %v747 = vld [vmem:[%s3 + $0x18] sm:$0xff]
      %v748 = vld [vmem:[%s3 + $0x20] sm:$0xff]
      %v749 = vld [vmem:[%s3 + $0x28] sm:$0xff]
      %v750 = vld [vmem:[%s3 + $0x30] sm:$0xff]
      %v751 = vld [vmem:[%s3 + $0x38] sm:$0xff]
      %v752 = vld [vmem:[%s3 + $0x40] sm:$0xff]
      %v753 = vld [vmem:[%s3 + $0x48] sm:$0xff]
      %v754 = vld [vmem:[%s3 + $0x50] sm:$0xff]
      %v755 = vld [vmem:[%s3 + $0x58] sm:$0xff]
      %v756 = vld [vmem:[%s3 + $0x60] sm:$0xff]
      %v757 = vld [vmem:[%s3 + $0x68] sm:$0xff]
      %v758 = vld [vmem:[%s3 + $0x70] sm:$0xff]
      %v759 = vld [vmem:[%s3 + $0x78] sm:$0xff]
      %760 = vmatprep.subr.mxu0 0.0
      %761 = vmatpush1.msra.mxu0 %v744
      %762 = vmatprep.subr.mxu0 0.0
      %763 = vmatpush1.msra.mxu0 %v745
      %764 = vmatprep.subr.mxu0 0.0
      %765 = vmatpush1.msra.mxu0 %v746
      %766 = vmatprep.subr.mxu0 0.0
      %767 = vmatpush1.msra.mxu0 %v747
      %768 = vmatprep.subr.mxu0 0.0
      %769 = vmatpush1.msra.mxu0 %v748
      %770 = vmatprep.subr.mxu0 0.0
      %771 = vmatpush1.msra.mxu0 %v749
      %772 = vmatprep.subr.mxu0 0.0
      %773 = vmatpush1.msra.mxu0 %v750
      %774 = vmatprep.subr.mxu0 0.0
      %775 = vmatpush1.msra.mxu0 %v751
      %776 = vmatprep.subr.mxu0 0.0
      %777 = vmatpush1.msra.mxu0 %v752
      %778 = vmatprep.subr.mxu0 0.0
      %779 = vmatpush1.msra.mxu0 %v753
      %780 = vmatprep.subr.mxu0 0.0
      %781 = vmatpush1.msra.mxu0 %v754
      %782 = vmatprep.subr.mxu0 0.0
      %783 = vmatpush1.msra.mxu0 %v755
      %784 = vmatprep.subr.mxu0 0.0
      %785 = vmatpush1.msra.mxu0 %v756
      %786 = vmatprep.subr.mxu0 0.0
      %787 = vmatpush1.msra.mxu0 %v757
      %788 = vmatprep.subr.mxu0 0.0
      %789 = vmatpush1.msra.mxu0 %v758
      %790 = vmatprep.subr.mxu0 0.0
      %791 = vmatpush1.msra.mxu0 %v759
      %792 = vmatprep.subr.mxu0 0.0
      %793 = vmatpush1.msra.mxu0 0.0
      %794 = vmatprep.subr.mxu0 0.0
      %795 = vmatpush1.msra.mxu0 0.0
      %796 = vmatprep.subr.mxu0 0.0
      %797 = vmatpush1.msra.mxu0 0.0
      %798 = vmatprep.subr.mxu0 0.0
      %799 = vmatpush1.msra.mxu0 0.0
      %800 = vmatprep.subr.mxu0 0.0
      %801 = vmatpush1.msra.mxu0 0.0
      %802 = vmatprep.subr.mxu0 0.0
      %803 = vmatpush1.msra.mxu0 0.0
      %804 = vmatprep.subr.mxu0 0.0
      %805 = vmatpush1.msra.mxu0 0.0
      %806 = vmatprep.subr.mxu0 0.0
      %807 = vmatpush1.msra.mxu0 0.0
      %808 = vmatprep.subr.mxu0 0.0
      %809 = vmatpush1.msra.mxu0 0.0
      %810 = vmatprep.subr.mxu0 0.0
      %811 = vmatpush1.msra.mxu0 0.0
      %812 = vmatprep.subr.mxu0 0.0
      %813 = vmatpush1.msra.mxu0 0.0
      %814 = vmatprep.subr.mxu0 0.0
      %815 = vmatpush1.msra.mxu0 0.0
      %816 = vmatprep.subr.mxu0 0.0
      %817 = vmatpush1.msra.mxu0 0.0
      %818 = vmatprep.subr.mxu0 0.0
      %819 = vmatpush1.msra.mxu0 0.0
      %820 = vmatprep.subr.mxu0 0.0
      %821 = vmatpush1.msra.mxu0 0.0
      %822 = vmatprep.subr.mxu0 0.0
      %823 = vmatpush1.msra.mxu0 0.0
      %824 = vmatprep.mubr.f32.mxu0 0.0
      %825 = vmatmul.mubr.f32.gmra.mrb[0].mxu0 %v728
      %v826 = vpop.f32.mrb[0].mxu0
      %v827 = vadd.f32 0.0, %v826
      %v828 = vpop.f32.mrb[0].mxu0
      %829 = vmatprep.mubr.f32.mxu0 0.0
      %830 = vmatmul.mubr.f32.gmra.mrb[0].mxu0 %v729
      %v831 = vpop.f32.mrb[0].mxu0
      %v832 = vadd.f32 0.0, %v831
      %v833 = vpop.f32.mrb[0].mxu0
      %834 = vmatprep.mubr.f32.mxu0 0.0
      %835 = vmatmul.mubr.f32.gmra.mrb[0].mxu0 %v730
      %v836 = vpop.f32.mrb[0].mxu0
      %v837 = vadd.f32 0.0, %v836
      %v838 = vpop.f32.mrb[0].mxu0
      %839 = vmatprep.mubr.f32.mxu0 0.0
      %840 = vmatmul.mubr.f32.gmra.mrb[0].mxu0 %v731
      %v841 = vpop.f32.mrb[0].mxu0
      %v842 = vadd.f32 0.0, %v841
      %v843 = vpop.f32.mrb[0].mxu0
      %844 = vmatprep.mubr.f32.mxu0 0.0
      %845 = vmatmul.mubr.f32.gmra.mrb[0].mxu0 %v732
      %v846 = vpop.f32.mrb[0].mxu0
      %v847 = vadd.f32 0.0, %v846
      %v848 = vpop.f32.mrb[0].mxu0
      %849 = vmatprep.mubr.f32.mxu0 0.0
      %850 = vmatmul.mubr.f32.gmra.mrb[0].mxu0 %v733
      %v851 = vpop.f32.mrb[0].mxu0
      %v852 = vadd.f32 0.0, %v851
      %v853 = vpop.f32.mrb[0].mxu0
      %854 = vmatprep.mubr.f32.mxu0 0.0
      %855 = vmatmul.mubr.f32.gmra.mrb[0].mxu0 %v734
      %v856 = vpop.f32.mrb[0].mxu0
      %v857 = vadd.f32 0.0, %v856
      %v858 = vpop.f32.mrb[0].mxu0
      %859 = vmatprep.mubr.f32.mxu0 0.0
      %860 = vmatmul.mubr.f32.gmra.mrb[0].mxu0 %v735
      %v861 = vpop.f32.mrb[0].mxu0
      %v862 = vadd.f32 0.0, %v861
      %v863 = vpop.f32.mrb[0].mxu0
      %864 = vmatprep.mubr.f32.mxu0 0.0
      %865 = vmatmul.mubr.f32.gmra.mrb[0].mxu0 %v736
      %v866 = vpop.f32.mrb[0].mxu0
      %v867 = vadd.f32 0.0, %v866
      %v868 = vpop.f32.mrb[0].mxu0
      %869 = vmatprep.mubr.f32.mxu0 0.0
      %870 = vmatmul.mubr.f32.gmra.mrb[0].mxu0 %v737
      %v871 = vpop.f32.mrb[0].mxu0
      %v872 = vadd.f32 0.0, %v871
      %v873 = vpop.f32.mrb[0].mxu0
      %874 = vmatprep.mubr.f32.mxu0 0.0
      %875 = vmatmul.mubr.f32.gmra.mrb[0].mxu0 %v738
      %v876 = vpop.f32.mrb[0].mxu0
      %v877 = vadd.f32 0.0, %v876
      %v878 = vpop.f32.mrb[0].mxu0
      %879 = vmatprep.mubr.f32.mxu0 0.0
      %880 = vmatmul.mubr.f32.gmra.mrb[0].mxu0 %v739
      %v881 = vpop.f32.mrb[0].mxu0
      %v882 = vadd.f32 0.0, %v881
      %v883 = vpop.f32.mrb[0].mxu0
      %884 = vmatprep.mubr.f32.mxu0 0.0
      %885 = vmatmul.mubr.f32.gmra.mrb[0].mxu0 %v740
      %v886 = vpop.f32.mrb[0].mxu0
      %v887 = vadd.f32 0.0, %v886
      %v888 = vpop.f32.mrb[0].mxu0
      %889 = vmatprep.mubr.f32.mxu0 0.0
      %890 = vmatmul.mubr.f32.gmra.mrb[0].mxu0 %v741
      %v891 = vpop.f32.mrb[0].mxu0
      %v892 = vadd.f32 0.0, %v891
      %v893 = vpop.f32.mrb[0].mxu0
      %894 = vmatprep.mubr.f32.mxu0 0.0
      %895 = vmatmul.mubr.f32.gmra.mrb[0].mxu0 %v742
      %v896 = vpop.f32.mrb[0].mxu0
      %v897 = vadd.f32 0.0, %v896
      %v898 = vpop.f32.mrb[0].mxu0
      %899 = vmatprep.mubr.f32.mxu0 0.0
      %900 = vmatmul.mubr.f32.gmra.mrb[0].mxu0 %v743
      %v901 = vpop.f32.mrb[0].mxu0
      %v902 = vadd.f32 0.0, %v901
      %v903 = vpop.f32.mrb[0].mxu0
      %904 = vdwg.mxu0
      %v905 = vld [vmem:[%s5] sm:$0x1]
      %v906 = vld [vmem:[%s269] sm:$0xff]
      %v907 = vld [vmem:[%s269 + $0x8] sm:$0xff]
      %v908 = vld [vmem:[%s269 + $0x10] sm:$0xff]
      %v909 = vld [vmem:[%s269 + $0x18] sm:$0xff]
      %v910 = vld [vmem:[%s269 + $0x20] sm:$0xff]
      %v911 = vld [vmem:[%s269 + $0x28] sm:$0xff]
      %v912 = vld [vmem:[%s269 + $0x30] sm:$0xff]
      %v913 = vld [vmem:[%s269 + $0x38] sm:$0xff]
      %v914 = vld [vmem:[%s269 + $0x40] sm:$0xff]
      %v915 = vld [vmem:[%s269 + $0x48] sm:$0xff]
      %v916 = vld [vmem:[%s269 + $0x50] sm:$0xff]
      %v917 = vld [vmem:[%s269 + $0x58] sm:$0xff]
      %v918 = vld [vmem:[%s269 + $0x60] sm:$0xff]
      %v919 = vld [vmem:[%s269 + $0x68] sm:$0xff]
      %v920 = vld [vmem:[%s269 + $0x70] sm:$0xff]
      %v921 = vld [vmem:[%s269 + $0x78] sm:$0xff]
      %v922 = vlaneseq
      %v923 = vshrl.u32 %v922, 7
      %v924 = vsub.s32 0, %v923
      %v925 = vrot.slane %v905, %v924
      %926 = vset.pattern.permute.xlu0 0
      %927 = vperm.xlu0 %926, %v906
      %v928 = vpop.permute.xlu0 %927
      %929 = vset.pattern.permute.xlu0 0
      %930 = vperm.xlu0 %929, %v907
      %v931 = vpop.permute.xlu0 %930
      %932 = vset.pattern.permute.xlu0 0
      %933 = vperm.xlu0 %932, %v908
      %v934 = vpop.permute.xlu0 %933
      %935 = vset.pattern.permute.xlu0 0
      %936 = vperm.xlu0 %935, %v909
      %v937 = vpop.permute.xlu0 %936
      %938 = vset.pattern.permute.xlu0 0
      %939 = vperm.xlu0 %938, %v910
      %v940 = vpop.permute.xlu0 %939
      %941 = vset.pattern.permute.xlu0 0
      %942 = vperm.xlu0 %941, %v911
      %v943 = vpop.permute.xlu0 %942
      %944 = vset.pattern.permute.xlu0 0
      %945 = vperm.xlu0 %944, %v912
      %v946 = vpop.permute.xlu0 %945
      %947 = vset.pattern.permute.xlu0 0
      %948 = vperm.xlu0 %947, %v913
      %v949 = vpop.permute.xlu0 %948
      %950 = vset.pattern.permute.xlu0 0
      %951 = vperm.xlu0 %950, %v914
      %v952 = vpop.permute.xlu0 %951
      %953 = vset.pattern.permute.xlu0 0
      %954 = vperm.xlu0 %953, %v915
      %v955 = vpop.permute.xlu0 %954
      %956 = vset.pattern.permute.xlu0 0
      %957 = vperm.xlu0 %956, %v916
      %v958 = vpop.permute.xlu0 %957
      %959 = vset.pattern.permute.xlu0 0
      %960 = vperm.xlu0 %959, %v917
      %v961 = vpop.permute.xlu0 %960
      %962 = vset.pattern.permute.xlu0 0
      %963 = vperm.xlu0 %962, %v918
      %v964 = vpop.permute.xlu0 %963
      %965 = vset.pattern.permute.xlu0 0
      %966 = vperm.xlu0 %965, %v919
      %v967 = vpop.permute.xlu0 %966
      %968 = vset.pattern.permute.xlu0 0
      %969 = vperm.xlu0 %968, %v920
      %v970 = vpop.permute.xlu0 %969
      %971 = vset.pattern.permute.xlu0 0
      %972 = vperm.xlu0 %971, %v921
      %v973 = vpop.permute.xlu0 %972
      %vm974 = vcmp.eq.s32.totalorder %v925, %v928
      %vm975 = vcmp.eq.s32.totalorder %v925, %v931
      %vm976 = vcmp.eq.s32.totalorder %v925, %v934
      %vm977 = vcmp.eq.s32.totalorder %v925, %v937
      %vm978 = vcmp.eq.s32.totalorder %v925, %v940
      %vm979 = vcmp.eq.s32.totalorder %v925, %v943
      %vm980 = vcmp.eq.s32.totalorder %v925, %v946
      %vm981 = vcmp.eq.s32.totalorder %v925, %v949
      %vm982 = vcmp.eq.s32.totalorder %v925, %v952
      %vm983 = vcmp.eq.s32.totalorder %v925, %v955
      %vm984 = vcmp.eq.s32.totalorder %v925, %v958
      %vm985 = vcmp.eq.s32.totalorder %v925, %v961
      %vm986 = vcmp.eq.s32.totalorder %v925, %v964
      %vm987 = vcmp.eq.s32.totalorder %v925, %v967
      %vm988 = vcmp.eq.s32.totalorder %v925, %v970
      %vm989 = vcmp.eq.s32.totalorder %v925, %v973
      %v990 = vsel %vm974, 1, 0
      %v991 = vsel %vm975, 1, 0
      %v992 = vsel %vm976, 1, 0
      %v993 = vsel %vm977, 1, 0
      %v994 = vsel %vm978, 1, 0
      %v995 = vsel %vm979, 1, 0
      %v996 = vsel %vm980, 1, 0
      %v997 = vsel %vm981, 1, 0
      %v998 = vsel %vm982, 1, 0
      %v999 = vsel %vm983, 1, 0
      %v1000 = vsel %vm984, 1, 0
      %v1001 = vsel %vm985, 1, 0
      %v1002 = vsel %vm986, 1, 0
      %v1003 = vsel %vm987, 1, 0
      %v1004 = vsel %vm988, 1, 0
      %v1005 = vsel %vm989, 1, 0
      %v1006 = vcvt.s32.f32 %v990
      %v1007 = vcvt.s32.f32 %v991
      %v1008 = vcvt.s32.f32 %v992
      %v1009 = vcvt.s32.f32 %v993
      %v1010 = vcvt.s32.f32 %v994
      %v1011 = vcvt.s32.f32 %v995
      %v1012 = vcvt.s32.f32 %v996
      %v1013 = vcvt.s32.f32 %v997
      %v1014 = vcvt.s32.f32 %v998
      %v1015 = vcvt.s32.f32 %v999
      %v1016 = vcvt.s32.f32 %v1000
      %v1017 = vcvt.s32.f32 %v1001
      %v1018 = vcvt.s32.f32 %v1002
      %v1019 = vcvt.s32.f32 %v1003
      %v1020 = vcvt.s32.f32 %v1004
      %v1021 = vcvt.s32.f32 %v1005
      %v1022 = vmul.f32 %v827, %v1006
      %v1023 = vmul.f32 %v832, %v1007
      %v1024 = vmul.f32 %v837, %v1008
      %v1025 = vmul.f32 %v842, %v1009
      %v1026 = vmul.f32 %v847, %v1010
      %v1027 = vmul.f32 %v852, %v1011
      %v1028 = vmul.f32 %v857, %v1012
      %v1029 = vmul.f32 %v862, %v1013
      %v1030 = vmul.f32 %v867, %v1014
      %v1031 = vmul.f32 %v872, %v1015
      %v1032 = vmul.f32 %v877, %v1016
      %v1033 = vmul.f32 %v882, %v1017
      %v1034 = vmul.f32 %v887, %v1018
      %v1035 = vmul.f32 %v892, %v1019
      %v1036 = vmul.f32 %v897, %v1020
      %v1037 = vmul.f32 %v902, %v1021
      %v1038 = vld [vmem:[%s4] sm:$0xff]
      %v1039 = vld [vmem:[%s4 + $0x8] sm:$0xff]
      %vm1040 = vcmask 130048
      %v1042 = vsel %vm1040, %v1022, 0
      %v1045 = vsel %vm1040, %v1023, 0
      %v1048 = vsel %vm1040, %v1024, 0
      %v1051 = vsel %vm1040, %v1025, 0
      %v1054 = vsel %vm1040, %v1026, 0
      %v1057 = vsel %vm1040, %v1027, 0
      %v1060 = vsel %vm1040, %v1028, 0
      %v1063 = vsel %vm1040, %v1029, 0
      %v1066 = vsel %vm1040, %v1030, 0
      %v1069 = vsel %vm1040, %v1031, 0
      %v1072 = vsel %vm1040, %v1032, 0
      %v1075 = vsel %vm1040, %v1033, 0
      %v1078 = vsel %vm1040, %v1034, 0
      %v1081 = vsel %vm1040, %v1035, 0
      %v1084 = vsel %vm1040, %v1036, 0
      %v1087 = vsel %vm1040, %v1037, 0
      %1089 = vmatprep.subr.mxu0 0.0
      %1090 = vmatpush1.msra.mxu0 %v1038
      %1091 = vmatprep.subr.mxu0 0.0
      %1092 = vmatpush1.msra.mxu0 %v1039
      %1093 = vmatprep.subr.mxu0 0.0
      %1094 = vmatpush1.msra.mxu0 0.0
      %1095 = vmatprep.subr.mxu0 0.0
      %1096 = vmatpush1.msra.mxu0 0.0
      %1097 = vmatprep.subr.mxu0 0.0
      %1098 = vmatpush1.msra.mxu0 0.0
      %1099 = vmatprep.subr.mxu0 0.0
      %1100 = vmatpush1.msra.mxu0 0.0
      %1101 = vmatprep.subr.mxu0 0.0
      %1102 = vmatpush1.msra.mxu0 0.0
      %1103 = vmatprep.subr.mxu0 0.0
      %1104 = vmatpush1.msra.mxu0 0.0
      %1105 = vmatprep.subr.mxu0 0.0
      %1106 = vmatpush1.msra.mxu0 0.0
      %1107 = vmatprep.subr.mxu0 0.0
      %1108 = vmatpush1.msra.mxu0 0.0
      %1109 = vmatprep.subr.mxu0 0.0
      %1110 = vmatpush1.msra.mxu0 0.0
      %1111 = vmatprep.subr.mxu0 0.0
      %1112 = vmatpush1.msra.mxu0 0.0
      %1113 = vmatprep.subr.mxu0 0.0
      %1114 = vmatpush1.msra.mxu0 0.0
      %1115 = vmatprep.subr.mxu0 0.0
      %1116 = vmatpush1.msra.mxu0 0.0
      %1117 = vmatprep.subr.mxu0 0.0
      %1118 = vmatpush1.msra.mxu0 0.0
      %1119 = vmatprep.subr.mxu0 0.0
      %1120 = vmatpush1.msra.mxu0 0.0
      %1121 = vmatprep.subr.mxu0 0.0
      %1122 = vmatpush1.msra.mxu0 0.0
      %1123 = vmatprep.subr.mxu0 0.0
      %1124 = vmatpush1.msra.mxu0 0.0
      %1125 = vmatprep.subr.mxu0 0.0
      %1126 = vmatpush1.msra.mxu0 0.0
      %1127 = vmatprep.subr.mxu0 0.0
      %1128 = vmatpush1.msra.mxu0 0.0
      %1129 = vmatprep.subr.mxu0 0.0
      %1130 = vmatpush1.msra.mxu0 0.0
      %1131 = vmatprep.subr.mxu0 0.0
      %1132 = vmatpush1.msra.mxu0 0.0
      %1133 = vmatprep.subr.mxu0 0.0
      %1134 = vmatpush1.msra.mxu0 0.0
      %1135 = vmatprep.subr.mxu0 0.0
      %1136 = vmatpush1.msra.mxu0 0.0
      %1137 = vmatprep.subr.mxu0 0.0
      %1138 = vmatpush1.msra.mxu0 0.0
      %1139 = vmatprep.subr.mxu0 0.0
      %1140 = vmatpush1.msra.mxu0 0.0
      %1141 = vmatprep.subr.mxu0 0.0
      %1142 = vmatpush1.msra.mxu0 0.0
      %1143 = vmatprep.subr.mxu0 0.0
      %1144 = vmatpush1.msra.mxu0 0.0
      %1145 = vmatprep.subr.mxu0 0.0
      %1146 = vmatpush1.msra.mxu0 0.0
      %1147 = vmatprep.subr.mxu0 0.0
      %1148 = vmatpush1.msra.mxu0 0.0
      %1149 = vmatprep.subr.mxu0 0.0
      %1150 = vmatpush1.msra.mxu0 0.0
      %1151 = vmatprep.subr.mxu0 0.0
      %1152 = vmatpush1.msra.mxu0 0.0
      %1153 = vmatprep.mubr.f32.mxu0 0.0
      %1154 = vmatmul.mubr.f32.gmra.mrb[0].mxu0 %v1042
      %v1155 = vpop.f32.mrb[0].mxu0
      %v1156 = vadd.f32 0.0, %v1155
      %v1157 = vpop.f32.mrb[0].mxu0
      %1158 = vmatprep.mubr.f32.mxu0 0.0
      %1159 = vmatmul.mubr.f32.gmra.mrb[0].mxu0 %v1045
      %v1160 = vpop.f32.mrb[0].mxu0
      %v1161 = vadd.f32 0.0, %v1160
      %v1162 = vpop.f32.mrb[0].mxu0
      %1163 = vmatprep.mubr.f32.mxu0 0.0
      %1164 = vmatmul.mubr.f32.gmra.mrb[0].mxu0 %v1048
      %v1165 = vpop.f32.mrb[0].mxu0
      %v1166 = vadd.f32 0.0, %v1165
      %v1167 = vpop.f32.mrb[0].mxu0
      %1168 = vmatprep.mubr.f32.mxu0 0.0
      %1169 = vmatmul.mubr.f32.gmra.mrb[0].mxu0 %v1051
      %v1170 = vpop.f32.mrb[0].mxu0
      %v1171 = vadd.f32 0.0, %v1170
      %v1172 = vpop.f32.mrb[0].mxu0
      %1173 = vmatprep.mubr.f32.mxu0 0.0
      %1174 = vmatmul.mubr.f32.gmra.mrb[0].mxu0 %v1054
      %v1175 = vpop.f32.mrb[0].mxu0
      %v1176 = vadd.f32 0.0, %v1175
      %v1177 = vpop.f32.mrb[0].mxu0
      %1178 = vmatprep.mubr.f32.mxu0 0.0
      %1179 = vmatmul.mubr.f32.gmra.mrb[0].mxu0 %v1057
      %v1180 = vpop.f32.mrb[0].mxu0
      %v1181 = vadd.f32 0.0, %v1180
      %v1182 = vpop.f32.mrb[0].mxu0
      %1183 = vmatprep.mubr.f32.mxu0 0.0
      %1184 = vmatmul.mubr.f32.gmra.mrb[0].mxu0 %v1060
      %v1185 = vpop.f32.mrb[0].mxu0
      %v1186 = vadd.f32 0.0, %v1185
      %v1187 = vpop.f32.mrb[0].mxu0
      %1188 = vmatprep.mubr.f32.mxu0 0.0
      %1189 = vmatmul.mubr.f32.gmra.mrb[0].mxu0 %v1063
      %v1190 = vpop.f32.mrb[0].mxu0
      %v1191 = vadd.f32 0.0, %v1190
      %v1192 = vpop.f32.mrb[0].mxu0
      %1193 = vmatprep.mubr.f32.mxu0 0.0
      %1194 = vmatmul.mubr.f32.gmra.mrb[0].mxu0 %v1066
      %v1195 = vpop.f32.mrb[0].mxu0
      %v1196 = vadd.f32 0.0, %v1195
      %v1197 = vpop.f32.mrb[0].mxu0
      %1198 = vmatprep.mubr.f32.mxu0 0.0
      %1199 = vmatmul.mubr.f32.gmra.mrb[0].mxu0 %v1069
      %v1200 = vpop.f32.mrb[0].mxu0
      %v1201 = vadd.f32 0.0, %v1200
      %v1202 = vpop.f32.mrb[0].mxu0
      %1203 = vmatprep.mubr.f32.mxu0 0.0
      %1204 = vmatmul.mubr.f32.gmra.mrb[0].mxu0 %v1072
      %v1205 = vpop.f32.mrb[0].mxu0
      %v1206 = vadd.f32 0.0, %v1205
      %v1207 = vpop.f32.mrb[0].mxu0
      %1208 = vmatprep.mubr.f32.mxu0 0.0
      %1209 = vmatmul.mubr.f32.gmra.mrb[0].mxu0 %v1075
      %v1210 = vpop.f32.mrb[0].mxu0
      %v1211 = vadd.f32 0.0, %v1210
      %v1212 = vpop.f32.mrb[0].mxu0
      %1213 = vmatprep.mubr.f32.mxu0 0.0
      %1214 = vmatmul.mubr.f32.gmra.mrb[0].mxu0 %v1078
      %v1215 = vpop.f32.mrb[0].mxu0
      %v1216 = vadd.f32 0.0, %v1215
      %v1217 = vpop.f32.mrb[0].mxu0
      %1218 = vmatprep.mubr.f32.mxu0 0.0
      %1219 = vmatmul.mubr.f32.gmra.mrb[0].mxu0 %v1081
      %v1220 = vpop.f32.mrb[0].mxu0
      %v1221 = vadd.f32 0.0, %v1220
      %v1222 = vpop.f32.mrb[0].mxu0
      %1223 = vmatprep.mubr.f32.mxu0 0.0
      %1224 = vmatmul.mubr.f32.gmra.mrb[0].mxu0 %v1084
      %v1225 = vpop.f32.mrb[0].mxu0
      %v1226 = vadd.f32 0.0, %v1225
      %v1227 = vpop.f32.mrb[0].mxu0
      %1228 = vmatprep.mubr.f32.mxu0 0.0
      %1229 = vmatmul.mubr.f32.gmra.mrb[0].mxu0 %v1087
      %v1230 = vpop.f32.mrb[0].mxu0
      %v1231 = vadd.f32 0.0, %v1230
      %v1232 = vpop.f32.mrb[0].mxu0
      %1233 = vdwg.mxu0
      %vm1234 = vcmask 31744
      %1235 = vst.msk [vmem:[%s275] sm:$0xff] %vm1234, %v1156
      %1236 = vst.msk [vmem:[%s275 + $0x8] sm:$0xff] %vm1234, %v1161
      %1237 = vst.msk [vmem:[%s275 + $0x10] sm:$0xff] %vm1234, %v1166
      %1238 = vst.msk [vmem:[%s275 + $0x18] sm:$0xff] %vm1234, %v1171
      %1239 = vst.msk [vmem:[%s275 + $0x20] sm:$0xff] %vm1234, %v1176
      %1240 = vst.msk [vmem:[%s275 + $0x28] sm:$0xff] %vm1234, %v1181
      %1241 = vst.msk [vmem:[%s275 + $0x30] sm:$0xff] %vm1234, %v1186
      %1242 = vst.msk [vmem:[%s275 + $0x38] sm:$0xff] %vm1234, %v1191
      %1243 = vst.msk [vmem:[%s275 + $0x40] sm:$0xff] %vm1234, %v1196
      %1244 = vst.msk [vmem:[%s275 + $0x48] sm:$0xff] %vm1234, %v1201
      %1245 = vst.msk [vmem:[%s275 + $0x50] sm:$0xff] %vm1234, %v1206
      %1246 = vst.msk [vmem:[%s275 + $0x58] sm:$0xff] %vm1234, %v1211
      %1247 = vst.msk [vmem:[%s275 + $0x60] sm:$0xff] %vm1234, %v1216
      %1248 = vst.msk [vmem:[%s275 + $0x68] sm:$0xff] %vm1234, %v1221
      %1249 = vst.msk [vmem:[%s275 + $0x70] sm:$0xff] %vm1234, %v1226
      %1250 = vst.msk [vmem:[%s275 + $0x78] sm:$0xff] %vm1234, %v1231
      %s1251 = smul.u32 16, %s17
      %p1252 = scmp.lt.s32.totalorder %s1251, 31
      %s1253 = scalar_select %p1252, %s1251, 31
      %s1254 = smul.addr %s1253, 8
      %s1255 = scalar_lea.vmem %s6, %s1254
      // Predicated region
      $region45: #{tpu_custom_call.1} parent=43 // pred_check
        %p1256 = pneg %p171
      $region46: #{tpu_custom_call.1} parent=43 // pred_check_branch
        %1258 = sbr.rel (%p1256) target = $region48
      $region47: #{tpu_custom_call.1} parent=43 // pred_region
        %s1259 = smul.u32 16, %s17
      $region48: #{tpu_custom_call.1} parent=43 // pred_fallthru
        _
    $region44: #{tpu_custom_call.1} parent=5 // pred_fallthru
      _
    %p1260 = scmp.le.s32.totalorder 2, %s12
    // Predicated region
    $region49: #{tpu_custom_call.1} parent=5 // pred_check
      %p1261 = pneg %p1260
    $region50: #{tpu_custom_call.1} parent=5 // pred_check_branch
      %1263 = sbr.rel (%p1261) target = $region52
    $region51: #{tpu_custom_call.1} parent=5 // pred_region
      %s1264 = ssub.s32 %s12, 2
      // Predicated region
      $region53: #{tpu_custom_call.1} parent=51 // pred_check
        %p1265 = pneg %p177
      $region54: #{tpu_custom_call.1} parent=51 // pred_check_branch
        %1267 = sbr.rel (%p1265) target = $region56
      $region55: #{tpu_custom_call.1} parent=51 // pred_region
        %s1268 = smul.u32 16, %s18
        %p1269 = scmp.lt.s32.totalorder %s1268, 31
        %s1270 = scalar_select %p1269, %s1268, 31
        %s1271 = smul.addr %s1270, 8
        %s1272 = scalar_lea.vmem %s6, %s1271
      $region56: #{tpu_custom_call.1} parent=51 // pred_fallthru
        _
    $region52: #{tpu_custom_call.1} parent=5 // pred_fallthru
      _
  $region6: #{tpu_custom_call.1} parent=0 // loop_footer
    %s16 = sadd.s32 1, %s12
  $region7: #{tpu_custom_call.1} parent=0 // loop_footer_branch
    %11 = sbr.rel target = $region3
  $region8: #{tpu_custom_call.1} parent=0 // loop_exit
    _

</llo_original>
